<compile_context>
chip_gen: v6e
topology: v6e:2x2x1
jax: 0.10.0
libtpu: 0.0.40
codegen_flags: <defaults>
</compile_context>

<pallas_src>
import functools

import jax
import jax.numpy as jnp
from jax.experimental import pallas as pl
from jax.experimental.pallas import tpu as pltpu


def _constant_pad2d_kernel(x_ref, value_ref, o_ref, *, pad_t, pad_b, pad_l, pad_r):
    # x_ref: (1, Cb, H, W)   o_ref: (1, Cb, H_out, W_out)   value_ref: (1,) f32 in SMEM
    _, cb, h, w = x_ref.shape
    _, _, h_out, w_out = o_ref.shape
    val = value_ref[0].astype(o_ref.dtype)

    # Border strips (static branches: pads are Python ints).  Each output
    # element is written exactly once.
    if pad_t > 0:
        o_ref[0, :, 0:pad_t, :] = jnp.full((cb, pad_t, w_out), val, dtype=o_ref.dtype)
    if pad_b > 0:
        o_ref[0, :, pad_t + h:h_out, :] = jnp.full((cb, pad_b, w_out), val, dtype=o_ref.dtype)
    if pad_l > 0:
        o_ref[0, :, pad_t:pad_t + h, 0:pad_l] = jnp.full((cb, h, pad_l), val, dtype=o_ref.dtype)
    if pad_r > 0:
        o_ref[0, :, pad_t:pad_t + h, pad_l + w:w_out] = jnp.full((cb, h, pad_r), val, dtype=o_ref.dtype)

    # Interior: single store of the input tile.
    o_ref[0, :, pad_t:pad_t + h, pad_l:pad_l + w] = x_ref[0]


def _pick_channel_block(n, c, h, w, h_out, w_out, itemsize):
    """Largest channel-block (divisor of c) with ~<=2 MiB of payload per block,
    while keeping at least 2 grid steps when possible (v7x: 2 TensorCores)."""
    target_bytes = 2 * 1024 * 1024
    per_channel = (h * w + h_out * w_out) * itemsize
    divisors = [d for d in range(1, c + 1) if c % d == 0]
    cb = 1
    for d in divisors:
        if d * per_channel <= target_bytes:
            cb = d
    while cb > 1 and n * (c // cb) < 2:
        cb = max(d for d in divisors if d < cb)
    return cb


def constant_pad_nd(x, padding, value, *, force_pallas=False):
    """Constant-pad the last two dims of an NCHW tensor (F.pad semantics).

    padding = (pad_left, pad_right, pad_top, pad_bottom)
    """
    assert x.ndim == 4, "this kernel handles NCHW (4-D) inputs"
    pad_l, pad_r, pad_t, pad_b = (int(p) for p in padding)
    assert min(pad_l, pad_r, pad_t, pad_b) >= 0, "negative (cropping) pads not supported"

    n, c, h, w = x.shape
    h_out = h + pad_t + pad_b
    w_out = w + pad_l + pad_r

    # Tiny tensors: launch + per-grid-step overhead dominates any hand kernel;
    # let XLA's fused pad handle them.
    out_bytes = n * c * h_out * w_out * x.dtype.itemsize
    if not force_pallas and out_bytes < 256 * 1024:
        return jnp.pad(
            x,
            ((0, 0), (0, 0), (pad_t, pad_b), (pad_l, pad_r)),
            mode="constant",
            constant_values=value,
        )

    cb = _pick_channel_block(n, c, h, w, h_out, w_out, x.dtype.itemsize)

    kernel = functools.partial(
        _constant_pad2d_kernel, pad_t=pad_t, pad_b=pad_b, pad_l=pad_l, pad_r=pad_r
    )
    value_arr = jnp.asarray([value], dtype=jnp.float32)

    return pl.pallas_call(
        kernel,
        out_shape=jax.ShapeDtypeStruct((n, c, h_out, w_out), x.dtype),
        grid=(n, c // cb),
        in_specs=[
            pl.BlockSpec((1, cb, h, w), lambda i, j: (i, j, 0, 0)),
            pl.BlockSpec(memory_space=pltpu.MemorySpace.SMEM),  # scalar pad value
        ],
        out_specs=pl.BlockSpec((1, cb, h_out, w_out), lambda i, j: (i, j, 0, 0)),
        compiler_params=pltpu.CompilerParams(
            dimension_semantics=("parallel", "parallel"),
            vmem_limit_bytes=32 * 1024 * 1024,
        ),
    )(x, value_arr)


class ConstantPadNd:
    """JAX/Pallas counterpart of torch.nn.modules.padding._ConstantPadNd (2-D padding)."""

    def __init__(self, padding, value, *, force_pallas=False):
        self.padding = tuple(int(p) for p in padding)  # (left, right, top, bottom)
        self.value = float(value)
        self.force_pallas = force_pallas

    def __call__(self, x):
        return constant_pad_nd(x, self.padding, self.value, force_pallas=self.force_pallas)


if __name__ == "__main__":
    key = jax.random.PRNGKey(0)
    # Small NCHW input: batch=2, channels=4, spatial 16x16
    x = jax.random.normal(key, (2, 4, 16, 16), dtype=jnp.float32)

    padding = (3, 1, 2, 4)  # (pad_left, pad_right, pad_top, pad_bottom)
    value = 1.5

    # force_pallas=True so the demo exercises the Pallas kernel even at this tiny size.
    mod = ConstantPadNd(padding, value, force_pallas=True)
    out = jax.block_until_ready(mod(x))

    # Reference (pure JAX): same semantics as F.pad constant mode.
    ref = jnp.pad(
        x,
        ((0, 0), (0, 0), (padding[2], padding[3]), (padding[0], padding[1])),
        mode="constant",
        constant_values=value,
    )
    assert out.shape == (2, 4, 16 + 2 + 4, 16 + 3 + 1), out.shape
    assert jnp.array_equal(out, ref), "mismatch vs reference (pallas path)"

    # Default (auto) path takes the tiny-tensor fast path; verify it matches too.
    out_auto = jax.block_until_ready(ConstantPadNd(padding, value)(x))
    assert jnp.array_equal(out_auto, ref), "mismatch vs reference (auto path)"

    print("KERNEL_OK")
</pallas_src>

<mosaic_0001>
module attributes {stable_mosaic.version = 11 : i64} {
  func.func @_constant_pad2d_kernel(%arg0: i32, %arg1: i32, %arg2: memref<1x4x16x16xf32, #tpu.memory_space<vmem>>, %arg3: memref<1xf32, #tpu.memory_space<smem>>, %arg4: memref<1x4x22x20xf32, #tpu.memory_space<vmem>>) attributes {dimension_semantics = [#tpu.dimension_semantics<parallel>, #tpu.dimension_semantics<parallel>], iteration_bounds = array<i64: 2, 1>, scalar_prefetch = 0 : i64, scratch_operands = 0 : i64, tpu.core_type = #tpu.core_type<tc>, window_params = [{transform_indices = @transform_0, window_bounds = array<i64: 1, 4, 16, 16>}, {transform_indices = @transform_1, window_bounds = array<i64: 1>}, {transform_indices = @transform_2, window_bounds = array<i64: 1, 4, 22, 20>}]} {
    %c0 = arith.constant 0 : index
    %0 = memref.load %arg3[%c0] : memref<1xf32, #tpu.memory_space<smem>>
    %1 = vector.broadcast %0 : f32 to vector<4x2x20xf32>
    %c0_0 = arith.constant 0 : index
    %c0_1 = arith.constant 0 : index
    %c0_2 = arith.constant 0 : index
    %c0_3 = arith.constant 0 : index
    %2 = vector.load %arg4[%c0_0, %c0_1, %c0_2, %c0_3] : memref<1x4x22x20xf32, #tpu.memory_space<vmem>>, vector<1x4x2x20xf32>
    %3 = vector.shape_cast %2 : vector<1x4x2x20xf32> to vector<4x2x20xf32>
    %4 = vector.shape_cast %1 : vector<4x2x20xf32> to vector<1x4x2x20xf32>
    tpu.vector_store %arg4[%c0_0, %c0_1, %c0_2, %c0_3], %4 {strides = array<i32>} : memref<1x4x22x20xf32, #tpu.memory_space<vmem>>, vector<1x4x2x20xf32>,
    %5 = vector.broadcast %0 : f32 to vector<4x4x20xf32>
    %c0_4 = arith.constant 0 : index
    %c0_5 = arith.constant 0 : index
    %c18 = arith.constant 18 : index
    %c0_6 = arith.constant 0 : index
    %6 = vector.load %arg4[%c0_4, %c0_5, %c18, %c0_6] : memref<1x4x22x20xf32, #tpu.memory_space<vmem>>, vector<1x4x4x20xf32>
    %7 = vector.shape_cast %6 : vector<1x4x4x20xf32> to vector<4x4x20xf32>
    %8 = vector.shape_cast %5 : vector<4x4x20xf32> to vector<1x4x4x20xf32>
    tpu.vector_store %arg4[%c0_4, %c0_5, %c18, %c0_6], %8 {strides = array<i32>} : memref<1x4x22x20xf32, #tpu.memory_space<vmem>>, vector<1x4x4x20xf32>,
    %9 = vector.broadcast %0 : f32 to vector<4x16x3xf32>
    %c0_7 = arith.constant 0 : index
    %c0_8 = arith.constant 0 : index
    %c2 = arith.constant 2 : index
    %c0_9 = arith.constant 0 : index
    %10 = vector.load %arg4[%c0_7, %c0_8, %c2, %c0_9] : memref<1x4x22x20xf32, #tpu.memory_space<vmem>>, vector<1x4x16x3xf32>
    %11 = vector.shape_cast %10 : vector<1x4x16x3xf32> to vector<4x16x3xf32>
    %12 = vector.shape_cast %9 : vector<4x16x3xf32> to vector<1x4x16x3xf32>
    tpu.vector_store %arg4[%c0_7, %c0_8, %c2, %c0_9], %12 {strides = array<i32>} : memref<1x4x22x20xf32, #tpu.memory_space<vmem>>, vector<1x4x16x3xf32>,
    %13 = vector.broadcast %0 : f32 to vector<4x16x1xf32>
    %c0_10 = arith.constant 0 : index
    %c0_11 = arith.constant 0 : index
    %c2_12 = arith.constant 2 : index
    %c19 = arith.constant 19 : index
    %14 = vector.load %arg4[%c0_10, %c0_11, %c2_12, %c19] : memref<1x4x22x20xf32, #tpu.memory_space<vmem>>, vector<1x4x16x1xf32>
    %15 = vector.shape_cast %14 : vector<1x4x16x1xf32> to vector<4x16x1xf32>
    %16 = vector.shape_cast %13 : vector<4x16x1xf32> to vector<1x4x16x1xf32>
    tpu.vector_store %arg4[%c0_10, %c0_11, %c2_12, %c19], %16 {strides = array<i32>} : memref<1x4x22x20xf32, #tpu.memory_space<vmem>>, vector<1x4x16x1xf32>,
    %c0_13 = arith.constant 0 : index
    %c0_14 = arith.constant 0 : index
    %c0_15 = arith.constant 0 : index
    %c0_16 = arith.constant 0 : index
    %17 = vector.load %arg2[%c0_13, %c0_14, %c0_15, %c0_16] : memref<1x4x16x16xf32, #tpu.memory_space<vmem>>, vector<1x4x16x16xf32>
    %18 = vector.shape_cast %17 : vector<1x4x16x16xf32> to vector<4x16x16xf32>
    %c0_17 = arith.constant 0 : index
    %c0_18 = arith.constant 0 : index
    %c2_19 = arith.constant 2 : index
    %c3 = arith.constant 3 : index
    %19 = vector.load %arg4[%c0_17, %c0_18, %c2_19, %c3] : memref<1x4x22x20xf32, #tpu.memory_space<vmem>>, vector<1x4x16x16xf32>
    %20 = vector.shape_cast %19 : vector<1x4x16x16xf32> to vector<4x16x16xf32>
    %21 = vector.shape_cast %18 : vector<4x16x16xf32> to vector<1x4x16x16xf32>
    tpu.vector_store %arg4[%c0_17, %c0_18, %c2_19, %c3], %21 {strides = array<i32>} : memref<1x4x22x20xf32, #tpu.memory_space<vmem>>, vector<1x4x16x16xf32>,
    return
  }
  func.func @transform_0(%arg0: i32, %arg1: i32) -> (i32, i32, i32, i32) {
    %c0_i32 = arith.constant 0 : i32
    %c0_i32_0 = arith.constant 0 : i32
    %c0_i32_1 = arith.constant 0 : i32
    return %arg0, %arg1, %c0_i32, %c0_i32_0 : i32, i32, i32, i32
  }
  func.func @transform_1(%arg0: i32, %arg1: i32) -> i32 {
    %c0_i32 = arith.constant 0 : i32
    %c0_i32_0 = arith.constant 0 : i32
    return %c0_i32 : i32
  }
  func.func @transform_2(%arg0: i32, %arg1: i32) -> (i32, i32, i32, i32) {
    %c0_i32 = arith.constant 0 : i32
    %c0_i32_0 = arith.constant 0 : i32
    %c0_i32_1 = arith.constant 0 : i32
    return %arg0, %arg1, %c0_i32, %c0_i32_0 : i32, i32, i32, i32
  }
}

</mosaic_0001>

<llo_original>
// kernel: tpu_custom_call.1
$region0: #{tpu_custom_call.1}
  #allocation0 [shape = 'u32[]', space=smem, size = 0x4, offset = 0x4, fixed_abs, tag = 'smem constant byte address 0x4 - core index']
  #allocation1 [shape = 'u32[144,128]{1,0:T(1,128)}', space=vmem, size = 0x12000, scoped, tag = 'internal scratch']
  #allocation2 [shape = 'f32[1]{0:T(128)S(6)}', space=smem, size = 0x200, scoped, tag = 'scoped memory for tpu_custom_call.1']
  %s0 = inlined_call_operand.hbm [shape: f32[2,4,16,16], index: 0, kind: input, shape index: {}]
  %s1 = inlined_call_operand.<no memory space> [shape: f32[1], index: 1, kind: input, shape index: {}]
  %s2 = inlined_call_operand.vmem [shape: f32[2,4,22,20], index: 2, kind: output, shape index: {}]
  %s3 = sld [smem:[#allocation0]]
  $region45: #{tpu_custom_call.1} parent=0
    _
  %s5 = ssub.s32 1, %s3
  %s6 = scalar_select 0, %s5, %s3
  %7 = sst [smem:[#allocation2]] %s1
  $region1: #{tpu_custom_call.1} parent=0
    #allocation3 [shape = 'u8[65536]{0}', space=vmem, size = 0x10000, scoped, tag = 'input window, operand 0']
    #allocation4 [shape = 's32[2]{0}', space=sflag, size = 0x8, scoped, tag = 'scoped memory for tpu_custom_call.1']
    %8 = vsyncpa [#allocation4], 0
    %s9 = scalar_lea.sflag [#allocation4], 1
    %10 = vsyncpa %s9, 0
    loop: start=0, step=1, limit=4
    $region2: #{tpu_custom_call.1} parent=1 // loop_pre_header
      _
    $region3: #{tpu_custom_call.1} parent=1 // loop_header
      %s12 = sphi 0, %s16
      %p13 = scmp.ge.s32.totalorder %s12, 4
      %s19 = sphi 0, %s31
      %s20 = sphi 0, %s27
      %s21 = sphi 0, %s19
      %s22 = sphi 0, %s20
      %s23 = sphi 0, %s21
      %s24 = sphi 0, %s22
      %s36 = sphi 0, %s38
      %s39 = sphi 0, %s36
      %s40 = sphi 0, %s39
      %s56 = sphi 0, %s40
      %s60 = sphi 0, %s60
      %s62 = sphi 0, %s60
      %s63 = sphi 0, %s62
      %s77 = sphi 0, %s63
      %s85 = sphi 0, %s87
      %s88 = sphi 0, %s85
      %s89 = sphi 0, %s88
      %s105 = sphi 0, %s89
    $region4: #{tpu_custom_call.1} parent=1 // loop_header_branch
      %15 = sbr.rel (%p13) target = $region8
    $region5: #{tpu_custom_call.1} parent=1 // loop_body
      %s17 = ssub.s32 %s12, 1
      %s18 = ssub.s32 %s12, 2
      %s25 = sadd.s32 1, %s20
      %p26 = scmp.ge.s32.totalorder %s25, 1
      %s27 = scalar_select %p26, 0, %s25
      %s28 = sadd.s32 1, %s19
      %s29 = scalar_select %p26, %s28, %s19
      %p30 = scmp.ge.s32.totalorder %s29, 2
      %s31 = scalar_select %p30, 0, %s29
      %s32 = ssub.s32 %s19, %s31
      %s33 = ssub.s32 %s20, %s27
      %s34 = sor.u32 %s32, %s33
      %p35 = scmp.eq.s32.totalorder %s34, 0
      %s37 = sadd.s32 %s36, 1
      %s38 = scalar_select %p35, %s36, %s37
      %p41 = pneg %p35
      %p42 = scmp.eq.s32.totalorder %s12, 1
      %p43 = por %p41, %p42
      %p44 = scmp.ne.s32.totalorder %s36, %s39
      %p45 = scmp.eq.s32.totalorder %s12, 0
      %p46 = por %p44, %p45
      %p47 = scmp.ne.s32.totalorder %s36, %s39
      %p48 = scmp.eq.s32.totalorder %s17, 1
      %p49 = por %p47, %p48
      %p50 = scmp.ne.s32.totalorder %s39, %s40
      %p51 = scmp.eq.s32.totalorder %s17, 0
      %p52 = por %p50, %p51
      %p53 = scmp.ne.s32.totalorder %s39, %s40
      %p54 = scmp.eq.s32.totalorder %s18, 1
      %p55 = por %p53, %p54
      %p57 = scmp.ne.s32.totalorder %s40, %s56
      %p58 = scmp.eq.s32.totalorder %s18, 0
      %p59 = por %p57, %p58
      %s61 = sadd.s32 %s60, 1
      %p64 = scmp.eq.s32.totalorder %s12, 1
      %p65 = scmp.ne.s32.totalorder %s60, %s62
      %p66 = scmp.eq.s32.totalorder %s12, 0
      %p67 = por %p65, %p66
      %p68 = scmp.ne.s32.totalorder %s60, %s62
      %p69 = scmp.eq.s32.totalorder %s17, 1
      %p70 = por %p68, %p69
      %p71 = scmp.ne.s32.totalorder %s62, %s63
      %p72 = scmp.eq.s32.totalorder %s17, 0
      %p73 = por %p71, %p72
      %p74 = scmp.ne.s32.totalorder %s62, %s63
      %p75 = scmp.eq.s32.totalorder %s18, 1
      %p76 = por %p74, %p75
      %p78 = scmp.ne.s32.totalorder %s63, %s77
      %p79 = scmp.eq.s32.totalorder %s18, 0
      %p80 = por %p78, %p79
      %s81 = ssub.s32 %s19, %s31
      %s82 = ssub.s32 %s20, %s27
      %s83 = sor.u32 %s81, %s82
      %p84 = scmp.eq.s32.totalorder %s83, 0
      %s86 = sadd.s32 %s85, 1
      %s87 = scalar_select %p84, %s85, %s86
      %p90 = pneg %p84
      %p91 = scmp.eq.s32.totalorder %s12, 1
      %p92 = por %p90, %p91
      %p93 = scmp.ne.s32.totalorder %s85, %s88
      %p94 = scmp.eq.s32.totalorder %s12, 0
      %p95 = por %p93, %p94
      %p96 = scmp.ne.s32.totalorder %s85, %s88
      %p97 = scmp.eq.s32.totalorder %s17, 1
      %p98 = por %p96, %p97
      %p99 = scmp.ne.s32.totalorder %s88, %s89
      %p100 = scmp.eq.s32.totalorder %s17, 0
      %p101 = por %p99, %p100
      %p102 = scmp.ne.s32.totalorder %s88, %s89
      %p103 = scmp.eq.s32.totalorder %s18, 1
      %p104 = por %p102, %p103
      %p106 = scmp.ne.s32.totalorder %s89, %s105
      %p107 = scmp.eq.s32.totalorder %s18, 0
      %p108 = por %p106, %p107
      %p109 = scmp.le.s32.totalorder 1, %s12
      %p110 = scmp.lt.s32.totalorder %s12, 3
      %p111 = pnand %p109, %p110
      %p112 = pneg %p111
      // Predicated region
      $region9: #{tpu_custom_call.1} parent=5 // pred_check
        _
      $region10: #{tpu_custom_call.1} parent=5 // pred_check_branch
        %114 = sbr.rel (%p111) target = $region12
      $region11: #{tpu_custom_call.1} parent=5 // pred_region
        %s115 = ssub.s32 %s12, 1
        // Predicated region
        $region13: #{tpu_custom_call.1} parent=11 // pred_check
          %p116 = pneg %p73
        $region14: #{tpu_custom_call.1} parent=11 // pred_check_branch
          %118 = sbr.rel (%p116) target = $region16
        $region15: #{tpu_custom_call.1} parent=11 // pred_region
          _
        $region16: #{tpu_custom_call.1} parent=11 // pred_fallthru
          _
      $region12: #{tpu_custom_call.1} parent=5 // pred_fallthru
        _
      %p119 = scmp.lt.s32.totalorder %s12, 2
      // Predicated region
      $region17: #{tpu_custom_call.1} parent=5 // pred_check
        %p120 = pneg %p119
      $region18: #{tpu_custom_call.1} parent=5 // pred_check_branch
        %122 = sbr.rel (%p120) target = $region20
      $region19: #{tpu_custom_call.1} parent=5 // pred_region
        // Predicated region
        $region21: #{tpu_custom_call.1} parent=19 // pred_check
          %p123 = pneg %p46
        $region22: #{tpu_custom_call.1} parent=19 // pred_check_branch
          %125 = sbr.rel (%p123) target = $region24
        $region23: #{tpu_custom_call.1} parent=19 // pred_region
          %s126 = sand.u32 %s36, 1
          %s127 = scalar_lea.sflag [#allocation4], %s126
          %s128 = sand.u32 %s36, 1
          %s129 = smul.addr %s128, 64
          %s130 = scalar_lea.vmem [#allocation3], %s129
          %s131 = smul.u32 4, %s20
          %s133 = ssub.s32 1024, 1024
          %134 = vsyncadd %s127, %s133
          %s135 = smul.addr %s131, 2
          %s136 = smul.addr %s19, 8
          %s137 = sadd.s32 %s135, %s136
          %s138 = smul.addr %s137, 128
          %s139 = scalar_lea.hbm %s0, %s138
          %s140 = sshll.u32 %s130, 4
          %s141 = int_to_ptr.vmem [resolvable:$true] %s140
          %146 = dma.hbm_to_vmem [thread:$0]  %s139, 1024, %s141, %s127, 128, 128, 8
        $region24: #{tpu_custom_call.1} parent=19 // pred_fallthru
          _
      $region20: #{tpu_custom_call.1} parent=5 // pred_fallthru
        _
      %p147 = scmp.le.s32.totalorder 1, %s12
      %p148 = scmp.lt.s32.totalorder %s12, 3
      %p149 = pnand %p147, %p148
      %p150 = pneg %p149
      // Predicated region
      $region25: #{tpu_custom_call.1} parent=5 // pred_check
        _
      $region26: #{tpu_custom_call.1} parent=5 // pred_check_branch
        %152 = sbr.rel (%p149) target = $region28
      $region27: #{tpu_custom_call.1} parent=5 // pred_region
        %s153 = ssub.s32 %s12, 1
        %s154 = sand.u32 %s39, 1
        %s155 = scalar_lea.sflag [#allocation4], %s154
        %s156 = sand.u32 %s39, 1
        %s157 = smul.addr %s156, 64
        %s158 = scalar_lea.vmem [#allocation3], %s157
        // Predicated region
        $region29: #{tpu_custom_call.1} parent=27 // pred_check
          %p159 = pneg %p52
        $region30: #{tpu_custom_call.1} parent=27 // pred_check_branch
          %161 = sbr.rel (%p159) target = $region32
        $region31: #{tpu_custom_call.1} parent=27 // pred_region
          %162 = dma.done %s155, 1024
        $region32: #{tpu_custom_call.1} parent=27 // pred_fallthru
          _
        %s163 = sand.u32 %s39, 1
        %s164 = scalar_lea.sflag [#allocation4], %s163
        %s165 = sand.u32 %s39, 1
        %s166 = smul.addr %s165, 64
        %s167 = scalar_lea.vmem [#allocation3], %s166
        %p168 = pneg %p52
        %p169 = pneg %p49
        %p170 = pneg %p73
        %p171 = pneg %p70
        %p172 = pneg %p101
        %p173 = pneg %p98
        %s174 = smul.u32 4, %s22
        %p175 = scmp.lt.s32.totalorder %s21, 1
        %s176 = scalar_select %p175, %s21, 1
        %p177 = scmp.lt.s32.totalorder %s174, 3
        %s178 = scalar_select %p177, %s174, 3
        %s179 = smul.addr %s178, 3
        %s180 = smul.addr %s176, 12
        %s181 = sadd.s32 %s179, %s180
        %s182 = smul.addr %s181, 8
        %s183 = scalar_lea.vmem %s2, %s182
        %s184 = smul.u32 4, %s22
        %s185 = smul.u32 4, %s22
        %p186 = scmp.lt.s32.totalorder %s21, 1
        %s187 = scalar_select %p186, %s21, 1
        %p188 = scmp.lt.s32.totalorder %s185, 3
        %s189 = scalar_select %p188, %s185, 3
        %s190 = smul.addr %s189, 3
        %s191 = smul.addr %s187, 12
        %s192 = sadd.s32 %s190, %s191
        %s193 = smul.addr %s192, 8
        %s194 = scalar_lea.vmem %s2, %s193
        %s195 = smul.u32 4, %s22
        %s196 = sld [smem:[#allocation2]]
        %v197 = vstv %s196
        %vm198 = vcmask 156672
        %199 = vst.msk [vmem:[%s194] sm:$0x3] %vm198, %v197
        %200 = vst.msk [vmem:[%s194 + $0x18] sm:$0x3] %vm198, %v197
        %201 = vst.msk [vmem:[%s194 + $0x30] sm:$0x3] %vm198, %v197
        %202 = vst.msk [vmem:[%s194 + $0x48] sm:$0x3] %vm198, %v197
        %vm203 = vcmask 158720
        %204 = vst.msk [vmem:[%s194 + $0x12] sm:$0xf] %vm203, %v197
        %205 = vst.msk [vmem:[%s194 + $0x2a] sm:$0xf] %vm203, %v197
        %206 = vst.msk [vmem:[%s194 + $0x42] sm:$0xf] %vm203, %v197
        %207 = vst.msk [vmem:[%s194 + $0x5a] sm:$0xf] %vm203, %v197
        %vm208 = vcmask 23552
        %209 = vst.msk [vmem:[%s194 + $0x2] sm:$0xff] %vm208, %v197
        %210 = vst.msk [vmem:[%s194 + $0xa] sm:$0xff] %vm208, %v197
        %211 = vst.msk [vmem:[%s194 + $0x1a] sm:$0xff] %vm208, %v197
        %212 = vst.msk [vmem:[%s194 + $0x22] sm:$0xff] %vm208, %v197
        %213 = vst.msk [vmem:[%s194 + $0x32] sm:$0xff] %vm208, %v197
        %214 = vst.msk [vmem:[%s194 + $0x3a] sm:$0xff] %vm208, %v197
        %215 = vst.msk [vmem:[%s194 + $0x4a] sm:$0xff] %vm208, %v197
        %216 = vst.msk [vmem:[%s194 + $0x52] sm:$0xff] %vm208, %v197
        %vm217 = vcmask 162968
        %218 = vst.msk [vmem:[%s194 + $0x2] sm:$0xff] %vm217, %v197
        %219 = vst.msk [vmem:[%s194 + $0xa] sm:$0xff] %vm217, %v197
        %220 = vst.msk [vmem:[%s194 + $0x1a] sm:$0xff] %vm217, %v197
        %221 = vst.msk [vmem:[%s194 + $0x22] sm:$0xff] %vm217, %v197
        %222 = vst.msk [vmem:[%s194 + $0x32] sm:$0xff] %vm217, %v197
        %223 = vst.msk [vmem:[%s194 + $0x3a] sm:$0xff] %vm217, %v197
        %224 = vst.msk [vmem:[%s194 + $0x4a] sm:$0xff] %vm217, %v197
        %225 = vst.msk [vmem:[%s194 + $0x52] sm:$0xff] %vm217, %v197
        %v226 = vld [vmem:[%s158] sm:$0xff]
        %v227 = vld [vmem:[%s158 + $0x8] sm:$0xff]
        %v228 = vld [vmem:[%s158 + $0x10] sm:$0xff]
        %v229 = vld [vmem:[%s158 + $0x18] sm:$0xff]
        %v230 = vld [vmem:[%s158 + $0x20] sm:$0xff]
        %v231 = vld [vmem:[%s158 + $0x28] sm:$0xff]
        %v232 = vld [vmem:[%s158 + $0x30] sm:$0xff]
        %v233 = vld [vmem:[%s158 + $0x38] sm:$0xff]
        %242 = vrot.lane.b32.xlu0 %v226, 3
        %v243 = vpop.permute.xlu0 %242
        %244 = vrot.lane.b32.xlu0 %v227, 3
        %v245 = vpop.permute.xlu0 %244
        %246 = vrot.lane.b32.xlu0 %v228, 3
        %v247 = vpop.permute.xlu0 %246
        %248 = vrot.lane.b32.xlu0 %v229, 3
        %v249 = vpop.permute.xlu0 %248
        %250 = vrot.lane.b32.xlu0 %v230, 3
        %v251 = vpop.permute.xlu0 %250
        %252 = vrot.lane.b32.xlu0 %v231, 3
        %v253 = vpop.permute.xlu0 %252
        %254 = vrot.lane.b32.xlu0 %v232, 3
        %v255 = vpop.permute.xlu0 %254
        %256 = vrot.lane.b32.xlu0 %v233, 3
        %v257 = vpop.permute.xlu0 %256
        %vm266 = vcmask 154648
        %267 = vst.msk [vmem:[%s194 + $0x2] sm:$0xff] %vm266, %v243
        %268 = vst.msk [vmem:[%s194 + $0xa] sm:$0xff] %vm266, %v245
        %269 = vst.msk [vmem:[%s194 + $0x1a] sm:$0xff] %vm266, %v247
        %270 = vst.msk [vmem:[%s194 + $0x22] sm:$0xff] %vm266, %v249
        %271 = vst.msk [vmem:[%s194 + $0x32] sm:$0xff] %vm266, %v251
        %272 = vst.msk [vmem:[%s194 + $0x3a] sm:$0xff] %vm266, %v253
        %273 = vst.msk [vmem:[%s194 + $0x4a] sm:$0xff] %vm266, %v255
        %274 = vst.msk [vmem:[%s194 + $0x52] sm:$0xff] %vm266, %v257
        %s275 = smul.u32 4, %s22
        %p276 = scmp.lt.s32.totalorder %s21, 1
        %s277 = scalar_select %p276, %s21, 1
        %p278 = scmp.lt.s32.totalorder %s275, 3
        %s279 = scalar_select %p278, %s275, 3
        %s280 = smul.addr %s279, 3
        %s281 = smul.addr %s277, 12
        %s282 = sadd.s32 %s280, %s281
        %s283 = smul.addr %s282, 8
        %s284 = scalar_lea.vmem %s2, %s283
        // Predicated region
        $region33: #{tpu_custom_call.1} parent=27 // pred_check
          %p285 = pneg %p98
        $region34: #{tpu_custom_call.1} parent=27 // pred_check_branch
          %287 = sbr.rel (%p285) target = $region36
        $region35: #{tpu_custom_call.1} parent=27 // pred_region
          %s288 = smul.u32 4, %s22
        $region36: #{tpu_custom_call.1} parent=27 // pred_fallthru
          _
      $region28: #{tpu_custom_call.1} parent=5 // pred_fallthru
        _
      %p289 = scmp.le.s32.totalorder 2, %s12
      // Predicated region
      $region37: #{tpu_custom_call.1} parent=5 // pred_check
        %p290 = pneg %p289
      $region38: #{tpu_custom_call.1} parent=5 // pred_check_branch
        %292 = sbr.rel (%p290) target = $region40
      $region39: #{tpu_custom_call.1} parent=5 // pred_region
        %s293 = ssub.s32 %s12, 2
        // Predicated region
        $region41: #{tpu_custom_call.1} parent=39 // pred_check
          %p294 = pneg %p104
        $region42: #{tpu_custom_call.1} parent=39 // pred_check_branch
          %296 = sbr.rel (%p294) target = $region44
        $region43: #{tpu_custom_call.1} parent=39 // pred_region
          %s297 = smul.u32 4, %s24
          %p298 = scmp.lt.s32.totalorder %s23, 1
          %s299 = scalar_select %p298, %s23, 1
          %p300 = scmp.lt.s32.totalorder %s297, 3
          %s301 = scalar_select %p300, %s297, 3
          %s302 = smul.addr %s301, 3
          %s303 = smul.addr %s299, 12
          %s304 = sadd.s32 %s302, %s303
          %s305 = smul.addr %s304, 8
          %s306 = scalar_lea.vmem %s2, %s305
        $region44: #{tpu_custom_call.1} parent=39 // pred_fallthru
          _
      $region40: #{tpu_custom_call.1} parent=5 // pred_fallthru
        _
    $region6: #{tpu_custom_call.1} parent=1 // loop_footer
      %s16 = sadd.s32 1, %s12
    $region7: #{tpu_custom_call.1} parent=1 // loop_footer_branch
      %11 = sbr.rel target = $region3
    $region8: #{tpu_custom_call.1} parent=1 // loop_exit
      _
    %307 = vsyncpa [#allocation4], 1
    %s308 = scalar_lea.sflag [#allocation4], 1
    %309 = vsyncpa %s308, 1

</llo_original>
